<compile_context>
chip_gen: v5e
topology: v5e:2x2
jax: 0.10.0
libtpu: 0.0.40
codegen_flags: <defaults>
</compile_context>

<pallas_src>
import jax
import jax.numpy as jnp
from jax import lax
from jax.experimental import pallas as pl
from jax.experimental.pallas import tpu as pltpu


def _round_up(v, m):
    return (v + m - 1) // m * m


# ------------------------------ Pallas wrapper ------------------------------
def fuse_block_pallas(x, w1_oihw, w3_oihw, g1, be1, m1, v1, g2, be2, m2, v2,
                      eps=1e-5):
    """x: (N, Cin, H, W) float32 (NCHW). Returns (N, Cout, H, W) float32."""
    N, Cin, H, W = x.shape
    Cout = w1_oihw.shape[0]
    Hp, Wp = H + 2, W + 2

    # ---- fold BN (eval) into weights/bias; fold 1x1 into 3x3 center tap ----
    s1 = g1 / jnp.sqrt(v1 + eps)
    s2 = g2 / jnp.sqrt(v2 + eps)
    wf = w3_oihw * s2[:, None, None, None]                       # (Cout,Cin,3,3)
    wf = wf.at[:, :, 1, 1].add(w1_oihw[:, :, 0, 0] * s1[:, None])
    # column order [ky, kx, ci] — must match the in-kernel tap stacking order
    w_fused = jnp.transpose(wf, (0, 2, 3, 1)).reshape(Cout, 9 * Cin)
    bias = ((be1 - m1 * s1) + (be2 - m2 * s2)).reshape(Cout, 1)

    # ---- flatten the spatially zero-padded image (no im2col, no transposes) ----
    Lout = _round_up(H * Wp, 128)                    # lane-dense output length
    Lin = _round_up(max(Hp * Wp, Lout + 2 * Wp + 2), 128)
    xpad = jnp.pad(x, ((0, 0), (0, 0), (1, 1), (1, 1)))          # (N,Cin,Hp,Wp)
    xflat = xpad.reshape(N, Cin, Hp * Wp)
    xflat = jnp.pad(xflat, ((0, 0), (0, 0), (0, Lin - Hp * Wp)))  # (N,Cin,Lin)

    def kernel(x_ref, w_ref, b_ref, o_ref):
        # x_ref: (Cin, Lin) flattened padded image; o_ref: (Cout, Lout).
        # Output flat position p = h*Wp + w holds output pixel (h, w); tap
        # (dy, dx) reads flat position p + dy*Wp + dx of the padded image.
        taps = []
        for dy in range(3):
            for dx in range(3):
                off = dy * Wp + dx
                taps.append(x_ref[:, off:off + Lout])            # (Cin, Lout)
        xs = jnp.concatenate(taps, axis=0)                       # (9*Cin, Lout)
        y = jnp.dot(w_ref[...], xs, preferred_element_type=jnp.float32)
        o_ref[...] = (y + b_ref[...]).astype(o_ref.dtype)

    out_flat = pl.pallas_call(
        kernel,
        out_shape=jax.ShapeDtypeStruct((N, Cout, Lout), jnp.float32),
        grid_spec=pltpu.PrefetchScalarGridSpec(
            num_scalar_prefetch=0,
            grid=(N,),
            in_specs=[
                pl.BlockSpec((None, Cin, Lin), lambda n: (n, 0, 0)),  # image n
                pl.BlockSpec((Cout, 9 * Cin), lambda n: (0, 0)),      # fused W
                pl.BlockSpec((Cout, 1), lambda n: (0, 0)),            # bias
            ],
            out_specs=pl.BlockSpec((None, Cout, Lout), lambda n: (n, 0, 0)),
        ),
        compiler_params=pltpu.CompilerParams(
            dimension_semantics=("parallel",)),
    )(xflat, w_fused, bias)

    # drop the padded columns; flat p = h*Wp + w  ->  (h, w)
    out = out_flat[:, :, :H * Wp].reshape(N, Cout, H, Wp)[:, :, :, :W]
    return out


# --------------------------- reference (pure JAX) ---------------------------
def fuse_block_ref(x_nchw, w1_oihw, w3_oihw, g1, be1, m1, v1, g2, be2, m2, v2,
                   eps=1e-5):
    def conv_bn(x, w, g, be, m, v, pad):
        y = lax.conv_general_dilated(
            x, w, window_strides=(1, 1), padding=[(pad, pad), (pad, pad)],
            dimension_numbers=("NCHW", "OIHW", "NCHW"))
        scale = g / jnp.sqrt(v + eps)
        bias = be - m * scale
        return y * scale[None, :, None, None] + bias[None, :, None, None]
    a = conv_bn(x_nchw, w1_oihw, g1, be1, m1, v1, pad=0)
    b = conv_bn(x_nchw, w3_oihw, g2, be2, m2, v2, pad=1)
    return a + b


# ---------------------------------- main ----------------------------------
if __name__ == "__main__":
    N, Cin, Cout, H, W = 2, 4, 8, 16, 16
    eps = 1e-5

    key = jax.random.PRNGKey(0)
    ks = jax.random.split(key, 12)

    x = jax.random.normal(ks[0], (N, Cin, H, W), jnp.float32)

    # conv weights (PyTorch OIHW layout, bias=False)
    w1_oihw = jax.random.normal(ks[1], (Cout, Cin, 1, 1), jnp.float32) * 0.1
    w3_oihw = jax.random.normal(ks[2], (Cout, Cin, 3, 3), jnp.float32) * 0.1

    # BatchNorm params (eval mode), deterministic synthetic values
    g1 = jax.random.normal(ks[3], (Cout,), jnp.float32) * 0.1 + 1.0
    be1 = jax.random.normal(ks[4], (Cout,), jnp.float32) * 0.1
    m1 = jax.random.normal(ks[5], (Cout,), jnp.float32) * 0.1
    v1 = jax.random.uniform(ks[6], (Cout,), jnp.float32, 0.5, 1.5)
    g2 = jax.random.normal(ks[7], (Cout,), jnp.float32) * 0.1 + 1.0
    be2 = jax.random.normal(ks[8], (Cout,), jnp.float32) * 0.1
    m2 = jax.random.normal(ks[9], (Cout,), jnp.float32) * 0.1
    v2 = jax.random.uniform(ks[10], (Cout,), jnp.float32, 0.5, 1.5)

    fuse = jax.jit(fuse_block_pallas)
    out = fuse(x, w1_oihw, w3_oihw, g1, be1, m1, v1, g2, be2, m2, v2)
    out = jax.block_until_ready(out)

    ref = fuse_block_ref(x, w1_oihw, w3_oihw, g1, be1, m1, v1, g2, be2, m2, v2,
                         eps=eps)
    assert out.shape == (N, Cout, H, W)
    assert jnp.allclose(out, ref, atol=1e-4, rtol=1e-4), (
        float(jnp.max(jnp.abs(out - ref))))

    print("KERNEL_OK")
</pallas_src>

<mosaic_0001>
module attributes {stable_mosaic.version = 11 : i64} {
  func.func @kernel(%arg0: i32, %arg1: memref<1x4x512xf32, #tpu.memory_space<vmem>>, %arg2: memref<8x36xf32, #tpu.memory_space<vmem>>, %arg3: memref<8x1xf32, #tpu.memory_space<vmem>>, %arg4: memref<1x8x384xf32, #tpu.memory_space<vmem>>) attributes {dimension_semantics = [#tpu.dimension_semantics<parallel>], iteration_bounds = array<i64: 2>, scalar_prefetch = 0 : i64, scratch_operands = 0 : i64, tpu.core_type = #tpu.core_type<tc>, window_params = [{transform_indices = @transform_0, window_bounds = array<i64: 1, 4, 512>}, {pipeline_mode = #tpu.pipeline_mode<synchronous>, transform_indices = @transform_1, window_bounds = array<i64: 8, 36>}, {pipeline_mode = #tpu.pipeline_mode<synchronous>, transform_indices = @transform_2, window_bounds = array<i64: 8, 1>}, {transform_indices = @transform_3, window_bounds = array<i64: 1, 8, 384>}]} {
    %c0 = arith.constant 0 : index
    %c0_0 = arith.constant 0 : index
    %c0_1 = arith.constant 0 : index
    %0 = vector.load %arg1[%c0, %c0_0, %c0_1] : memref<1x4x512xf32, #tpu.memory_space<vmem>>, vector<1x4x384xf32>
    %1 = vector.shape_cast %0 : vector<1x4x384xf32> to vector<4x384xf32>
    %c0_2 = arith.constant 0 : index
    %c0_3 = arith.constant 0 : index
    %c1 = arith.constant 1 : index
    %2 = vector.load %arg1[%c0_2, %c0_3, %c1] : memref<1x4x512xf32, #tpu.memory_space<vmem>>, vector<1x4x384xf32>
    %3 = vector.shape_cast %2 : vector<1x4x384xf32> to vector<4x384xf32>
    %c0_4 = arith.constant 0 : index
    %c0_5 = arith.constant 0 : index
    %c2 = arith.constant 2 : index
    %4 = vector.load %arg1[%c0_4, %c0_5, %c2] : memref<1x4x512xf32, #tpu.memory_space<vmem>>, vector<1x4x384xf32>
    %5 = vector.shape_cast %4 : vector<1x4x384xf32> to vector<4x384xf32>
    %c0_6 = arith.constant 0 : index
    %c0_7 = arith.constant 0 : index
    %c18 = arith.constant 18 : index
    %6 = vector.load %arg1[%c0_6, %c0_7, %c18] : memref<1x4x512xf32, #tpu.memory_space<vmem>>, vector<1x4x384xf32>
    %7 = vector.shape_cast %6 : vector<1x4x384xf32> to vector<4x384xf32>
    %c0_8 = arith.constant 0 : index
    %c0_9 = arith.constant 0 : index
    %c19 = arith.constant 19 : index
    %8 = vector.load %arg1[%c0_8, %c0_9, %c19] : memref<1x4x512xf32, #tpu.memory_space<vmem>>, vector<1x4x384xf32>
    %9 = vector.shape_cast %8 : vector<1x4x384xf32> to vector<4x384xf32>
    %c0_10 = arith.constant 0 : index
    %c0_11 = arith.constant 0 : index
    %c20 = arith.constant 20 : index
    %10 = vector.load %arg1[%c0_10, %c0_11, %c20] : memref<1x4x512xf32, #tpu.memory_space<vmem>>, vector<1x4x384xf32>
    %11 = vector.shape_cast %10 : vector<1x4x384xf32> to vector<4x384xf32>
    %c0_12 = arith.constant 0 : index
    %c0_13 = arith.constant 0 : index
    %c36 = arith.constant 36 : index
    %12 = vector.load %arg1[%c0_12, %c0_13, %c36] : memref<1x4x512xf32, #tpu.memory_space<vmem>>, vector<1x4x384xf32>
    %13 = vector.shape_cast %12 : vector<1x4x384xf32> to vector<4x384xf32>
    %c0_14 = arith.constant 0 : index
    %c0_15 = arith.constant 0 : index
    %c37 = arith.constant 37 : index
    %14 = vector.load %arg1[%c0_14, %c0_15, %c37] : memref<1x4x512xf32, #tpu.memory_space<vmem>>, vector<1x4x384xf32>
    %15 = vector.shape_cast %14 : vector<1x4x384xf32> to vector<4x384xf32>
    %c0_16 = arith.constant 0 : index
    %c0_17 = arith.constant 0 : index
    %c38 = arith.constant 38 : index
    %16 = vector.load %arg1[%c0_16, %c0_17, %c38] : memref<1x4x512xf32, #tpu.memory_space<vmem>>, vector<1x4x384xf32>
    %17 = vector.shape_cast %16 : vector<1x4x384xf32> to vector<4x384xf32>
    %18 = tpu.concatenate %1, %3, %5, %7, %9, %11, %13, %15, %17 in 0 : vector<4x384xf32>, vector<4x384xf32>, vector<4x384xf32>, vector<4x384xf32>, vector<4x384xf32>, vector<4x384xf32>, vector<4x384xf32>, vector<4x384xf32>, vector<4x384xf32> -> vector<36x384xf32>
    %c0_18 = arith.constant 0 : index
    %c0_19 = arith.constant 0 : index
    %19 = vector.load %arg2[%c0_18, %c0_19] : memref<8x36xf32, #tpu.memory_space<vmem>>, vector<8x36xf32>
    %cst = arith.constant dense<0.000000e+00> : vector<8x384xf32>
    %20 = tpu.matmul %19, %18, %cst {dimension_numbers = #tpu.dot_dimension_numbers<[1], [0], [0], [1], [0, 0, 1, 1], [], []>} : vector<8x36xf32>, vector<36x384xf32>, vector<8x384xf32> -> vector<8x384xf32>
    %c0_20 = arith.constant 0 : index
    %c0_21 = arith.constant 0 : index
    %21 = vector.load %arg3[%c0_20, %c0_21] : memref<8x1xf32, #tpu.memory_space<vmem>>, vector<8x1xf32>
    %22 = vector.broadcast %21 : vector<8x1xf32> to vector<8x384xf32>
    %23 = arith.addf %20, %22 : vector<8x384xf32>
    %c0_22 = arith.constant 0 : index
    %c0_23 = arith.constant 0 : index
    %c0_24 = arith.constant 0 : index
    %24 = vector.load %arg4[%c0_22, %c0_23, %c0_24] : memref<1x8x384xf32, #tpu.memory_space<vmem>>, vector<1x8x384xf32>
    %25 = vector.shape_cast %24 : vector<1x8x384xf32> to vector<8x384xf32>
    %26 = vector.shape_cast %23 : vector<8x384xf32> to vector<1x8x384xf32>
    tpu.vector_store %arg4[%c0_22, %c0_23, %c0_24], %26 {strides = array<i32>} : memref<1x8x384xf32, #tpu.memory_space<vmem>>, vector<1x8x384xf32>,
    return
  }
  func.func @transform_0(%arg0: i32) -> (i32, i32, i32) {
    %c0_i32 = arith.constant 0 : i32
    %c0_i32_0 = arith.constant 0 : i32
    %c0_i32_1 = arith.constant 0 : i32
    return %arg0, %c0_i32, %c0_i32_0 : i32, i32, i32
  }
  func.func @transform_1(%arg0: i32) -> (i32, i32) {
    %c0_i32 = arith.constant 0 : i32
    %c0_i32_0 = arith.constant 0 : i32
    %c0_i32_1 = arith.constant 0 : i32
    return %c0_i32, %c0_i32_0 : i32, i32
  }
  func.func @transform_2(%arg0: i32) -> (i32, i32) {
    %c0_i32 = arith.constant 0 : i32
    %c0_i32_0 = arith.constant 0 : i32
    %c0_i32_1 = arith.constant 0 : i32
    return %c0_i32, %c0_i32_0 : i32, i32
  }
  func.func @transform_3(%arg0: i32) -> (i32, i32, i32) {
    %c0_i32 = arith.constant 0 : i32
    %c0_i32_0 = arith.constant 0 : i32
    %c0_i32_1 = arith.constant 0 : i32
    return %arg0, %c0_i32, %c0_i32_0 : i32, i32, i32
  }
}

</mosaic_0001>

<llo_original>
// kernel: fuse_block_pallas.1
$region0: #{fuse_block_pallas.1}
  #allocation0 [shape = 'u32[]', space=smem, size = 0x4, offset = 0x4, fixed_abs, tag = 'smem constant byte address 0x4 - core index']
  #allocation1 [shape = 'u32[72,128]{1,0:T(1,128)}', space=vmem, size = 0x9000, scoped, tag = 'internal scratch']
  %s0 = inlined_call_operand.vmem [shape: f32[2,4,512], index: 0, kind: input, shape index: {}]
  %s1 = inlined_call_operand.vmem [shape: f32[8,36], index: 1, kind: input, shape index: {}]
  %s2 = inlined_call_operand.vmem [shape: f32[8,1], index: 2, kind: input, shape index: {}]
  %s3 = inlined_call_operand.vmem [shape: f32[2,8,384], index: 3, kind: output, shape index: {}]
  %s4 = sld [smem:[#allocation0]]
  $region45: #{fuse_block_pallas.1} parent=0
    _
  %s6 = ssub.s32 1, %s4
  %s7 = scalar_select 0, %s6, %s4
  loop: start=0, step=1, limit=4
  $region2: #{fuse_block_pallas.1} parent=0 // loop_pre_header
    _
  $region3: #{fuse_block_pallas.1} parent=0 // loop_header
    %s9 = sphi 0, %s13
    %p10 = scmp.ge.s32.totalorder %s9, 4
    %s19 = sphi 0, %s21
    %s22 = sphi 0, %s19
    %s23 = sphi 0, %s22
    %s39 = sphi 0, %s23
    %s43 = sphi 0, %s43
    %s45 = sphi 0, %s43
    %s46 = sphi 0, %s45
    %s60 = sphi 0, %s46
    %s64 = sphi 0, %s64
    %s66 = sphi 0, %s64
    %s67 = sphi 0, %s66
    %s81 = sphi 0, %s67
    %s87 = sphi 0, %s89
    %s90 = sphi 0, %s87
    %s91 = sphi 0, %s90
    %s107 = sphi 0, %s91
  $region4: #{fuse_block_pallas.1} parent=0 // loop_header_branch
    %12 = sbr.rel (%p10) target = $region8
  $region5: #{fuse_block_pallas.1} parent=0 // loop_body
    %s14 = ssub.s32 %s9, 1
    %s15 = ssub.s32 %s9, 2
    %s16 = sadd.s32 %s9, 1
    %s17 = ssub.s32 %s9, %s16
    %p18 = scmp.eq.s32.totalorder %s17, 0
    %s20 = sadd.s32 %s19, 1
    %s21 = scalar_select %p18, %s19, %s20
    %p24 = pneg %p18
    %p25 = scmp.eq.s32.totalorder %s9, 1
    %p26 = por %p24, %p25
    %p27 = scmp.ne.s32.totalorder %s19, %s22
    %p28 = scmp.eq.s32.totalorder %s9, 0
    %p29 = por %p27, %p28
    %p30 = scmp.ne.s32.totalorder %s19, %s22
    %p31 = scmp.eq.s32.totalorder %s14, 1
    %p32 = por %p30, %p31
    %p33 = scmp.ne.s32.totalorder %s22, %s23
    %p34 = scmp.eq.s32.totalorder %s14, 0
    %p35 = por %p33, %p34
    %p36 = scmp.ne.s32.totalorder %s22, %s23
    %p37 = scmp.eq.s32.totalorder %s15, 1
    %p38 = por %p36, %p37
    %p40 = scmp.ne.s32.totalorder %s23, %s39
    %p41 = scmp.eq.s32.totalorder %s15, 0
    %p42 = por %p40, %p41
    %s44 = sadd.s32 %s43, 1
    %p47 = scmp.eq.s32.totalorder %s9, 1
    %p48 = scmp.ne.s32.totalorder %s43, %s45
    %p49 = scmp.eq.s32.totalorder %s9, 0
    %p50 = por %p48, %p49
    %p51 = scmp.ne.s32.totalorder %s43, %s45
    %p52 = scmp.eq.s32.totalorder %s14, 1
    %p53 = por %p51, %p52
    %p54 = scmp.ne.s32.totalorder %s45, %s46
    %p55 = scmp.eq.s32.totalorder %s14, 0
    %p56 = por %p54, %p55
    %p57 = scmp.ne.s32.totalorder %s45, %s46
    %p58 = scmp.eq.s32.totalorder %s15, 1
    %p59 = por %p57, %p58
    %p61 = scmp.ne.s32.totalorder %s46, %s60
    %p62 = scmp.eq.s32.totalorder %s15, 0
    %p63 = por %p61, %p62
    %s65 = sadd.s32 %s64, 1
    %p68 = scmp.eq.s32.totalorder %s9, 1
    %p69 = scmp.ne.s32.totalorder %s64, %s66
    %p70 = scmp.eq.s32.totalorder %s9, 0
    %p71 = por %p69, %p70
    %p72 = scmp.ne.s32.totalorder %s64, %s66
    %p73 = scmp.eq.s32.totalorder %s14, 1
    %p74 = por %p72, %p73
    %p75 = scmp.ne.s32.totalorder %s66, %s67
    %p76 = scmp.eq.s32.totalorder %s14, 0
    %p77 = por %p75, %p76
    %p78 = scmp.ne.s32.totalorder %s66, %s67
    %p79 = scmp.eq.s32.totalorder %s15, 1
    %p80 = por %p78, %p79
    %p82 = scmp.ne.s32.totalorder %s67, %s81
    %p83 = scmp.eq.s32.totalorder %s15, 0
    %p84 = por %p82, %p83
    %s85 = ssub.s32 %s9, %s16
    %p86 = scmp.eq.s32.totalorder %s85, 0
    %s88 = sadd.s32 %s87, 1
    %s89 = scalar_select %p86, %s87, %s88
    %p92 = pneg %p86
    %p93 = scmp.eq.s32.totalorder %s9, 1
    %p94 = por %p92, %p93
    %p95 = scmp.ne.s32.totalorder %s87, %s90
    %p96 = scmp.eq.s32.totalorder %s9, 0
    %p97 = por %p95, %p96
    %p98 = scmp.ne.s32.totalorder %s87, %s90
    %p99 = scmp.eq.s32.totalorder %s14, 1
    %p100 = por %p98, %p99
    %p101 = scmp.ne.s32.totalorder %s90, %s91
    %p102 = scmp.eq.s32.totalorder %s14, 0
    %p103 = por %p101, %p102
    %p104 = scmp.ne.s32.totalorder %s90, %s91
    %p105 = scmp.eq.s32.totalorder %s15, 1
    %p106 = por %p104, %p105
    %p108 = scmp.ne.s32.totalorder %s91, %s107
    %p109 = scmp.eq.s32.totalorder %s15, 0
    %p110 = por %p108, %p109
    %p111 = scmp.le.s32.totalorder 1, %s9
    %p112 = scmp.lt.s32.totalorder %s9, 3
    %p113 = pnand %p111, %p112
    %p114 = pneg %p113
    // Predicated region
    $region9: #{fuse_block_pallas.1} parent=5 // pred_check
      _
    $region10: #{fuse_block_pallas.1} parent=5 // pred_check_branch
      %116 = sbr.rel (%p113) target = $region12
    $region11: #{fuse_block_pallas.1} parent=5 // pred_region
      %s117 = ssub.s32 %s9, 1
      // Predicated region
      $region13: #{fuse_block_pallas.1} parent=11 // pred_check
        %p118 = pneg %p56
      $region14: #{fuse_block_pallas.1} parent=11 // pred_check_branch
        %120 = sbr.rel (%p118) target = $region16
      $region15: #{fuse_block_pallas.1} parent=11 // pred_region
        _
      $region16: #{fuse_block_pallas.1} parent=11 // pred_fallthru
        _
      // Predicated region
      $region17: #{fuse_block_pallas.1} parent=11 // pred_check
        %p121 = pneg %p77
      $region18: #{fuse_block_pallas.1} parent=11 // pred_check_branch
        %123 = sbr.rel (%p121) target = $region20
      $region19: #{fuse_block_pallas.1} parent=11 // pred_region
        _
      $region20: #{fuse_block_pallas.1} parent=11 // pred_fallthru
        _
    $region12: #{fuse_block_pallas.1} parent=5 // pred_fallthru
      _
    %p124 = scmp.lt.s32.totalorder %s9, 2
    // Predicated region
    $region21: #{fuse_block_pallas.1} parent=5 // pred_check
      %p125 = pneg %p124
    $region22: #{fuse_block_pallas.1} parent=5 // pred_check_branch
      %127 = sbr.rel (%p125) target = $region24
    $region23: #{fuse_block_pallas.1} parent=5 // pred_region
      // Predicated region
      $region25: #{fuse_block_pallas.1} parent=23 // pred_check
        %p128 = pneg %p29
      $region26: #{fuse_block_pallas.1} parent=23 // pred_check_branch
        %130 = sbr.rel (%p128) target = $region28
      $region27: #{fuse_block_pallas.1} parent=23 // pred_region
        %p131 = scmp.lt.s32.totalorder %s9, 1
        %s132 = scalar_select %p131, %s9, 1
        %s133 = smul.addr %s132, 4
        %s134 = smul.addr %s133, 4
        %s135 = scalar_lea.vmem %s0, %s134
      $region28: #{fuse_block_pallas.1} parent=23 // pred_fallthru
        _
    $region24: #{fuse_block_pallas.1} parent=5 // pred_fallthru
      _
    %p136 = scmp.le.s32.totalorder 1, %s9
    %p137 = scmp.lt.s32.totalorder %s9, 3
    %p138 = pnand %p136, %p137
    %p139 = pneg %p138
    // Predicated region
    $region29: #{fuse_block_pallas.1} parent=5 // pred_check
      _
    $region30: #{fuse_block_pallas.1} parent=5 // pred_check_branch
      %141 = sbr.rel (%p138) target = $region32
    $region31: #{fuse_block_pallas.1} parent=5 // pred_region
      %s142 = ssub.s32 %s9, 1
      %p143 = scmp.lt.s32.totalorder %s14, 1
      %s144 = scalar_select %p143, %s14, 1
      %s145 = smul.addr %s144, 4
      %s146 = smul.addr %s145, 4
      %s147 = scalar_lea.vmem %s0, %s146
      %p148 = pneg %p35
      %p149 = pneg %p32
      %p150 = pneg %p56
      %p151 = pneg %p53
      %p152 = pneg %p77
      %p153 = pneg %p74
      %p154 = pneg %p103
      %p155 = pneg %p100
      %p156 = scmp.lt.s32.totalorder %s14, 1
      %s157 = scalar_select %p156, %s14, 1
      %s158 = smul.addr %s157, 3
      %s159 = smul.addr %s158, 8
      %s160 = scalar_lea.vmem %s3, %s159
      %p161 = scmp.lt.s32.totalorder %s14, 1
      %s162 = scalar_select %p161, %s14, 1
      %s163 = smul.addr %s162, 4
      %s164 = smul.addr %s163, 4
      %s165 = scalar_lea.vmem %s0, %s164
      %p166 = scmp.lt.s32.totalorder %s14, 1
      %s167 = scalar_select %p166, %s14, 1
      %s168 = smul.addr %s167, 3
      %s169 = smul.addr %s168, 8
      %s170 = scalar_lea.vmem %s3, %s169
      %v171 = vld [vmem:[%s165] sm:$0xff]
      %v172 = vld [vmem:[%s165 + $0x8] sm:$0xf]
      %v173 = vld [vmem:[%s165] sm:$0xff]
      %v174 = vld [vmem:[%s165 + $0x8] sm:$0xff]
      %177 = vst [vmem:[#allocation1] ss:$2 sm:$0xff] %v171
      %s178 = scalar_lea.vmem [#allocation1], 16
      %179 = vst [vmem:[%s178] ss:$2 sm:$0xff] %v172
      %v180 = vld.sshfl [vmem:[#allocation1] sm:$0xff pattern:$0x75316420]
      %v181 = vld.sshfl [vmem:[#allocation1 + $0x8] sm:$0xff pattern:$0x75316420]
      %v182 = vld.sshfl [vmem:[#allocation1 + $0x10] sm:$0xff pattern:$0x75316420]
      %s188 = scalar_lea.vmem [#allocation1], 1
      %189 = vst [vmem:[%s188] ss:$2 sm:$0xff] %v173
      %s190 = scalar_lea.vmem [#allocation1], 17
      %191 = vst [vmem:[%s190] ss:$2 sm:$0xff] %v174
      %v192 = vld.sshfl [vmem:[#allocation1] sm:$0xff pattern:$0x75316420]
      %v193 = vld.sshfl [vmem:[#allocation1 + $0x8] sm:$0xff pattern:$0x75316420]
      %v194 = vld.sshfl [vmem:[#allocation1 + $0x10] sm:$0xff pattern:$0x75316420]
      %v195 = vld.sshfl [vmem:[#allocation1 + $0x18] sm:$0xff pattern:$0x75316420]
      %196 = vrot.lane.b32.xlu0 %v192, 127
      %v197 = vpop.permute.xlu0 %196
      %198 = vrot.lane.b32.xlu0 %v193, 127
      %v199 = vpop.permute.xlu0 %198
      %200 = vrot.lane.b32.xlu0 %v194, 127
      %v201 = vpop.permute.xlu0 %200
      %202 = vrot.lane.b32.xlu0 %v195, 127
      %v203 = vpop.permute.xlu0 %202
      %vm204 = vcmask 1039360
      %v205 = vsel %vm204, %v197, %v199
      %v206 = vsel %vm204, %v199, %v201
      %v207 = vsel %vm204, %v201, %v203
      %211 = vst [vmem:[#allocation1] ss:$2 sm:$0xff] %v173
      %s212 = scalar_lea.vmem [#allocation1], 16
      %213 = vst [vmem:[%s212] ss:$2 sm:$0xff] %v174
      %v214 = vld.sshfl [vmem:[#allocation1] sm:$0xff pattern:$0x75316420]
      %v215 = vld.sshfl [vmem:[#allocation1 + $0x8] sm:$0xff pattern:$0x75316420]
      %v216 = vld.sshfl [vmem:[#allocation1 + $0x10] sm:$0xff pattern:$0x75316420]
      %v217 = vld.sshfl [vmem:[#allocation1 + $0x18] sm:$0xff pattern:$0x75316420]
      %218 = vrot.lane.b32.xlu0 %v214, 126
      %v219 = vpop.permute.xlu0 %218
      %220 = vrot.lane.b32.xlu0 %v215, 126
      %v221 = vpop.permute.xlu0 %220
      %222 = vrot.lane.b32.xlu0 %v216, 126
      %v223 = vpop.permute.xlu0 %222
      %224 = vrot.lane.b32.xlu0 %v217, 126
      %v225 = vpop.permute.xlu0 %224
      %vm226 = vcmask 1031168
      %v227 = vsel %vm226, %v219, %v221
      %v228 = vsel %vm226, %v221, %v223
      %v229 = vsel %vm226, %v223, %v225
      %s233 = scalar_lea.vmem [#allocation1], 1
      %234 = vst [vmem:[%s233] ss:$2 sm:$0xff] %v173
      %s235 = scalar_lea.vmem [#allocation1], 17
      %236 = vst [vmem:[%s235] ss:$2 sm:$0xff] %v174
      %v237 = vld.sshfl [vmem:[#allocation1] sm:$0xff pattern:$0x75316420]
      %v238 = vld.sshfl [vmem:[#allocation1 + $0x8] sm:$0xff pattern:$0x75316420]
      %v239 = vld.sshfl [vmem:[#allocation1 + $0x10] sm:$0xff pattern:$0x75316420]
      %v240 = vld.sshfl [vmem:[#allocation1 + $0x18] sm:$0xff pattern:$0x75316420]
      %241 = vrot.lane.b32.xlu0 %v237, 110
      %v242 = vpop.permute.xlu0 %241
      %243 = vrot.lane.b32.xlu0 %v238, 110
      %v244 = vpop.permute.xlu0 %243
      %245 = vrot.lane.b32.xlu0 %v239, 110
      %v246 = vpop.permute.xlu0 %245
      %247 = vrot.lane.b32.xlu0 %v240, 110
      %v248 = vpop.permute.xlu0 %247
      %vm249 = vcmask 900096
      %v250 = vsel %vm249, %v242, %v244
      %v251 = vsel %vm249, %v244, %v246
      %v252 = vsel %vm249, %v246, %v248
      %256 = vst [vmem:[#allocation1] ss:$2 sm:$0xff] %v173
      %s257 = scalar_lea.vmem [#allocation1], 16
      %258 = vst [vmem:[%s257] ss:$2 sm:$0xff] %v174
      %v259 = vld.sshfl [vmem:[#allocation1] sm:$0xff pattern:$0x75316420]
      %v260 = vld.sshfl [vmem:[#allocation1 + $0x8] sm:$0xff pattern:$0x75316420]
      %v261 = vld.sshfl [vmem:[#allocation1 + $0x10] sm:$0xff pattern:$0x75316420]
      %v262 = vld.sshfl [vmem:[#allocation1 + $0x18] sm:$0xff pattern:$0x75316420]
      %263 = vrot.lane.b32.xlu0 %v259, 109
      %v264 = vpop.permute.xlu0 %263
      %265 = vrot.lane.b32.xlu0 %v260, 109
      %v266 = vpop.permute.xlu0 %265
      %267 = vrot.lane.b32.xlu0 %v261, 109
      %v268 = vpop.permute.xlu0 %267
      %269 = vrot.lane.b32.xlu0 %v262, 109
      %v270 = vpop.permute.xlu0 %269
      %vm271 = vcmask 891904
      %v272 = vsel %vm271, %v264, %v266
      %v273 = vsel %vm271, %v266, %v268
      %v274 = vsel %vm271, %v268, %v270
      %s278 = scalar_lea.vmem [#allocation1], 1
      %279 = vst [vmem:[%s278] ss:$2 sm:$0xff] %v173
      %s280 = scalar_lea.vmem [#allocation1], 17
      %281 = vst [vmem:[%s280] ss:$2 sm:$0xff] %v174
      %v282 = vld.sshfl [vmem:[#allocation1] sm:$0xff pattern:$0x75316420]
      %v283 = vld.sshfl [vmem:[#allocation1 + $0x8] sm:$0xff pattern:$0x75316420]
      %v284 = vld.sshfl [vmem:[#allocation1 + $0x10] sm:$0xff pattern:$0x75316420]
      %v285 = vld.sshfl [vmem:[#allocation1 + $0x18] sm:$0xff pattern:$0x75316420]
      %286 = vrot.lane.b32.xlu0 %v282, 108
      %v287 = vpop.permute.xlu0 %286
      %288 = vrot.lane.b32.xlu0 %v283, 108
      %v289 = vpop.permute.xlu0 %288
      %290 = vrot.lane.b32.xlu0 %v284, 108
      %v291 = vpop.permute.xlu0 %290
      %292 = vrot.lane.b32.xlu0 %v285, 108
      %v293 = vpop.permute.xlu0 %292
      %vm294 = vcmask 883712
      %v295 = vsel %vm294, %v287, %v289
      %v296 = vsel %vm294, %v289, %v291
      %v297 = vsel %vm294, %v291, %v293
      %301 = vst [vmem:[#allocation1] ss:$2 sm:$0xff] %v173
      %s302 = scalar_lea.vmem [#allocation1], 16
      %303 = vst [vmem:[%s302] ss:$2 sm:$0xff] %v174
      %v304 = vld.sshfl [vmem:[#allocation1] sm:$0xff pattern:$0x75316420]
      %v305 = vld.sshfl [vmem:[#allocation1 + $0x8] sm:$0xff pattern:$0x75316420]
      %v306 = vld.sshfl [vmem:[#allocation1 + $0x10] sm:$0xff pattern:$0x75316420]
      %v307 = vld.sshfl [vmem:[#allocation1 + $0x18] sm:$0xff pattern:$0x75316420]
      %308 = vrot.lane.b32.xlu0 %v304, 92
      %v309 = vpop.permute.xlu0 %308
      %310 = vrot.lane.b32.xlu0 %v305, 92
      %v311 = vpop.permute.xlu0 %310
      %312 = vrot.lane.b32.xlu0 %v306, 92
      %v313 = vpop.permute.xlu0 %312
      %314 = vrot.lane.b32.xlu0 %v307, 92
      %v315 = vpop.permute.xlu0 %314
      %vm316 = vcmask 752640
      %v317 = vsel %vm316, %v309, %v311
      %v318 = vsel %vm316, %v311, %v313
      %v319 = vsel %vm316, %v313, %v315
      %s323 = scalar_lea.vmem [#allocation1], 1
      %324 = vst [vmem:[%s323] ss:$2 sm:$0xff] %v173
      %s325 = scalar_lea.vmem [#allocation1], 17
      %326 = vst [vmem:[%s325] ss:$2 sm:$0xff] %v174
      %v327 = vld.sshfl [vmem:[#allocation1] sm:$0xff pattern:$0x75316420]
      %v328 = vld.sshfl [vmem:[#allocation1 + $0x8] sm:$0xff pattern:$0x75316420]
      %v329 = vld.sshfl [vmem:[#allocation1 + $0x10] sm:$0xff pattern:$0x75316420]
      %v330 = vld.sshfl [vmem:[#allocation1 + $0x18] sm:$0xff pattern:$0x75316420]
      %331 = vrot.lane.b32.xlu0 %v327, 91
      %v332 = vpop.permute.xlu0 %331
      %333 = vrot.lane.b32.xlu0 %v328, 91
      %v334 = vpop.permute.xlu0 %333
      %335 = vrot.lane.b32.xlu0 %v329, 91
      %v336 = vpop.permute.xlu0 %335
      %337 = vrot.lane.b32.xlu0 %v330, 91
      %v338 = vpop.permute.xlu0 %337
      %vm339 = vcmask 744448
      %v340 = vsel %vm339, %v332, %v334
      %v341 = vsel %vm339, %v334, %v336
      %v342 = vsel %vm339, %v336, %v338
      %346 = vst [vmem:[#allocation1] ss:$2 sm:$0xff] %v173
      %s347 = scalar_lea.vmem [#allocation1], 16
      %348 = vst [vmem:[%s347] ss:$2 sm:$0xff] %v174
      %v349 = vld.sshfl [vmem:[#allocation1] sm:$0xff pattern:$0x75316420]
      %v350 = vld.sshfl [vmem:[#allocation1 + $0x8] sm:$0xff pattern:$0x75316420]
      %v351 = vld.sshfl [vmem:[#allocation1 + $0x10] sm:$0xff pattern:$0x75316420]
      %v352 = vld.sshfl [vmem:[#allocation1 + $0x18] sm:$0xff pattern:$0x75316420]
      %353 = vrot.lane.b32.xlu0 %v349, 90
      %v354 = vpop.permute.xlu0 %353
      %355 = vrot.lane.b32.xlu0 %v350, 90
      %v356 = vpop.permute.xlu0 %355
      %357 = vrot.lane.b32.xlu0 %v351, 90
      %v358 = vpop.permute.xlu0 %357
      %359 = vrot.lane.b32.xlu0 %v352, 90
      %v360 = vpop.permute.xlu0 %359
      %vm361 = vcmask 736256
      %v362 = vsel %vm361, %v354, %v356
      %v363 = vsel %vm361, %v356, %v358
      %v364 = vsel %vm361, %v358, %v360
      %vm365 = vcmask 1043456
      %v366 = vsel %vm365, %v180, %v205
      %v367 = vsel %vm365, %v181, %v206
      %v368 = vsel %vm365, %v182, %v207
      %v369 = vsel %vm365, %v227, %v250
      %v370 = vsel %vm365, %v228, %v251
      %v371 = vsel %vm365, %v229, %v252
      %v372 = vsel %vm365, %v272, %v295
      %v373 = vsel %vm365, %v273, %v296
      %v374 = vsel %vm365, %v274, %v297
      %v375 = vsel %vm365, %v317, %v340
      %v376 = vsel %vm365, %v318, %v341
      %v377 = vsel %vm365, %v319, %v342
      %v378 = vld [vmem:[%s1] sm:$0xff]
      %v379 = vld [vmem:[%s2] sm:$0xff]
      %381 = vset.pattern.permute.xlu0 0
      %382 = vperm.xlu0 %381, %v379
      %v383 = vpop.permute.xlu0 %382
      %vm385 = vcmask 293888
      %v387 = vsel %vm385, %v378, 0
      %v389 = vsel %vm365, %v362, 0
      %v391 = vsel %vm365, %v363, 0
      %v393 = vsel %vm365, %v364, 0
      %395 = vmatpush.msra.mxu0 0.0
      %396 = vmatpush.msra.mxu0 0.0
      %397 = vmatpush.msra.mxu0 0.0
      %398 = vmatpush.msra.mxu0 0.0
      %399 = vmatpush.msra.mxu0 0.0
      %400 = vmatpush.msra.mxu0 0.0
      %401 = vmatpush.msra.mxu0 0.0
      %402 = vmatpush.msra.mxu0 0.0
      %403 = vmatpush.msra.mxu0 0.0
      %404 = vmatpush.msra.mxu0 0.0
      %405 = vmatpush.msra.mxu0 0.0
      %406 = vmatpush.msra.mxu0 %v389
      %407 = vmatpush.msra.mxu0 %v375
      %408 = vmatpush.msra.mxu0 %v372
      %409 = vmatpush.msra.mxu0 %v369
      %410 = vmatpush.msra.mxu0 %v366
      %411 = vmatmul.f32.gmra.mxu0 %v387
      %v412 = vpop.f32.mrf.mxu0
      %v413 = vadd.f32 %v383, %v412
      %414 = vdwg.mxu0
      %415 = vmatpush.msra.mxu0 0.0
      %416 = vmatpush.msra.mxu0 0.0
      %417 = vmatpush.msra.mxu0 0.0
      %418 = vmatpush.msra.mxu0 0.0
      %419 = vmatpush.msra.mxu0 0.0
      %420 = vmatpush.msra.mxu0 0.0
      %421 = vmatpush.msra.mxu0 0.0
      %422 = vmatpush.msra.mxu0 0.0
      %423 = vmatpush.msra.mxu0 0.0
      %424 = vmatpush.msra.mxu0 0.0
      %425 = vmatpush.msra.mxu0 0.0
      %426 = vmatpush.msra.mxu0 %v391
      %427 = vmatpush.msra.mxu0 %v376
      %428 = vmatpush.msra.mxu0 %v373
      %429 = vmatpush.msra.mxu0 %v370
      %430 = vmatpush.msra.mxu0 %v367
      %431 = vmatmul.f32.gmra.mxu0 %v387
      %v432 = vpop.f32.mrf.mxu0
      %v433 = vadd.f32 %v383, %v432
      %434 = vdwg.mxu0
      %435 = vmatpush.msra.mxu0 0.0
      %436 = vmatpush.msra.mxu0 0.0
      %437 = vmatpush.msra.mxu0 0.0
      %438 = vmatpush.msra.mxu0 0.0
      %439 = vmatpush.msra.mxu0 0.0
      %440 = vmatpush.msra.mxu0 0.0
      %441 = vmatpush.msra.mxu0 0.0
      %442 = vmatpush.msra.mxu0 0.0
      %443 = vmatpush.msra.mxu0 0.0
      %444 = vmatpush.msra.mxu0 0.0
      %445 = vmatpush.msra.mxu0 0.0
      %446 = vmatpush.msra.mxu0 %v393
      %447 = vmatpush.msra.mxu0 %v377
      %448 = vmatpush.msra.mxu0 %v374
      %449 = vmatpush.msra.mxu0 %v371
      %450 = vmatpush.msra.mxu0 %v368
      %451 = vmatmul.f32.gmra.mxu0 %v387
      %v452 = vpop.f32.mrf.mxu0
      %v453 = vadd.f32 %v383, %v452
      %454 = vdwg.mxu0
      %455 = vst [vmem:[%s170] sm:$0xff] %v413
      %456 = vst [vmem:[%s170 + $0x8] sm:$0xff] %v433
      %457 = vst [vmem:[%s170 + $0x10] sm:$0xff] %v453
      %p458 = scmp.lt.s32.totalorder %s14, 1
      %s459 = scalar_select %p458, %s14, 1
      %s460 = smul.addr %s459, 3
      %s461 = smul.addr %s460, 8
      %s462 = scalar_lea.vmem %s3, %s461
      // Predicated region
      $region33: #{fuse_block_pallas.1} parent=31 // pred_check
        %p463 = pneg %p100
      $region34: #{fuse_block_pallas.1} parent=31 // pred_check_branch
        %465 = sbr.rel (%p463) target = $region36
      $region35: #{fuse_block_pallas.1} parent=31 // pred_region
        _
      $region36: #{fuse_block_pallas.1} parent=31 // pred_fallthru
        _
    $region32: #{fuse_block_pallas.1} parent=5 // pred_fallthru
      _
    %p466 = scmp.le.s32.totalorder 2, %s9
    // Predicated region
    $region37: #{fuse_block_pallas.1} parent=5 // pred_check
      %p467 = pneg %p466
    $region38: #{fuse_block_pallas.1} parent=5 // pred_check_branch
      %469 = sbr.rel (%p467) target = $region40
    $region39: #{fuse_block_pallas.1} parent=5 // pred_region
      %s470 = ssub.s32 %s9, 2
      // Predicated region
      $region41: #{fuse_block_pallas.1} parent=39 // pred_check
        %p471 = pneg %p106
      $region42: #{fuse_block_pallas.1} parent=39 // pred_check_branch
        %473 = sbr.rel (%p471) target = $region44
      $region43: #{fuse_block_pallas.1} parent=39 // pred_region
        %p474 = scmp.lt.s32.totalorder %s15, 1
        %s475 = scalar_select %p474, %s15, 1
        %s476 = smul.addr %s475, 3
        %s477 = smul.addr %s476, 8
        %s478 = scalar_lea.vmem %s3, %s477
      $region44: #{fuse_block_pallas.1} parent=39 // pred_fallthru
        _
    $region40: #{fuse_block_pallas.1} parent=5 // pred_fallthru
      _
  $region6: #{fuse_block_pallas.1} parent=0 // loop_footer
    %s13 = sadd.s32 1, %s9
  $region7: #{fuse_block_pallas.1} parent=0 // loop_footer_branch
    %8 = sbr.rel target = $region3
  $region8: #{fuse_block_pallas.1} parent=0 // loop_exit
    _

</llo_original>
